<compile_context>
chip_gen: v5e
topology: v5e:2x2
jax: 0.10.0
libtpu: 0.0.40
codegen_flags: <defaults>
</compile_context>

<pallas_src>
import math

import jax
import jax.numpy as jnp
from jax.experimental import pallas as pl
from jax.experimental.pallas import tpu as pltpu


LANE = 128


# ---------------------------------------------------------------------------
# Helpers
# ---------------------------------------------------------------------------

def _round_up(x, m):
    return ((x + m - 1) // m) * m


def _vmem_limit_bytes():
    """Per-generation scoped-VMEM budget (v7x: 64 MiB phys, v5e/v6e: 128 MiB)."""
    cap = 64 * 1024 * 1024
    try:
        info = pltpu.get_tpu_info()
        cap = int(getattr(info, "vmem_capacity_bytes", cap)) or cap
    except Exception:
        pass
    return int(cap * 3 // 4)          # ~48 MiB on v7x, ~96 MiB on v5e/v6e


def _choose_tiles(n):
    """padded node count + (row tile, K tile) that divide it exactly."""
    n_pad = _round_up(max(n, 256), 256)              # pad only to 256, not to tk
    tk = max(t for t in (1024, 512, 256) if n_pad % t == 0)
    tm = max(t for t in (512, 256) if n_pad % t == 0)
    # v7x megacore: the "parallel" row axis only splits across the 2 TensorCores
    # if there are >= 2 (ideally an even number of) row tiles.
    while tm > 128 and (n_pad // tm < 2 or (n_pad // tm) % 2 == 1):
        tm //= 2
    return n_pad, tm, tk


def _pad2(x, rows, cols, dtype):
    out = jnp.zeros((rows, cols), dtype)
    return out.at[: x.shape[0], : x.shape[1]].set(x.astype(dtype))


# ---------------------------------------------------------------------------
# Pallas kernels
# ---------------------------------------------------------------------------

def _make_agg_kernel(apply_w, fuse_mlp, h_resident, tk):
    """One GraphConv layer, tiled over (row tiles, K reduction).

    Epilogue (at the last K step, on the f32 VMEM accumulator):
      apply_w:   z = acc.bf16 @ W            (aggregate-then-project)
      else:      z = acc                     (projection already done)
      z = ReLU(z + b)
      fuse_mlp:  z = z.bf16 @ Wo + bo        (fused 1-layer MLP classifier)
    """

    def kernel(*refs):
        idx = 0
        a_ref = refs[idx]; idx += 1
        h_ref = refs[idx]; idx += 1
        if apply_w:
            w_ref = refs[idx]; idx += 1
        b_ref = refs[idx]; idx += 1
        if fuse_mlp:
            wo_ref = refs[idx]; bo_ref = refs[idx + 1]; idx += 2
        o_ref = refs[idx]
        acc_ref = refs[idx + 1]

        k = pl.program_id(1)

        @pl.when(k == 0)
        def _():
            acc_ref[...] = jnp.zeros_like(acc_ref)

        if h_resident:
            off = pl.multiple_of(k * tk, tk)
            h_blk = h_ref[pl.ds(off, tk), :]          # slice the resident h
        else:
            h_blk = h_ref[...]
        acc_ref[...] += jnp.dot(a_ref[...], h_blk,
                                preferred_element_type=jnp.float32)

        @pl.when(k == pl.num_programs(1) - 1)
        def _():
            z = acc_ref[...]
            if apply_w:
                z = jnp.dot(z.astype(jnp.bfloat16), w_ref[...],
                            preferred_element_type=jnp.float32)
            z = jnp.maximum(z + b_ref[...].astype(jnp.float32), 0.0)
            if fuse_mlp:
                z = (jnp.dot(z.astype(jnp.bfloat16), wo_ref[...],
                             preferred_element_type=jnp.float32)
                     + bo_ref[...].astype(jnp.float32))
            o_ref[...] = z.astype(o_ref.dtype)

    return kernel


def _project_kernel(x_ref, w_ref, o_ref):
    """hw = x @ W (no bias / activation) — used for project-then-aggregate."""
    o_ref[...] = jnp.dot(x_ref[...], w_ref[...],
                         preferred_element_type=jnp.float32).astype(o_ref.dtype)


# ---------------------------------------------------------------------------
# pallas_call wrappers
# ---------------------------------------------------------------------------

def _project_call(x_p, w, tm, vmem_limit):
    n_pad, fp_in = x_p.shape
    fp_out = w.shape[1]
    grid = (n_pad // tm,)
    return pl.pallas_call(
        _project_kernel,
        out_shape=jax.ShapeDtypeStruct((n_pad, fp_out), jnp.bfloat16),
        grid=grid,
        in_specs=[pl.BlockSpec((tm, fp_in), lambda i: (i, 0)),
                  pl.BlockSpec(w.shape, lambda i: (0, 0))],
        out_specs=pl.BlockSpec((tm, fp_out), lambda i: (i, 0)),
        compiler_params=pltpu.CompilerParams(
            dimension_semantics=("parallel",),
            vmem_limit_bytes=vmem_limit),
        cost_estimate=pl.CostEstimate(
            flops=int(2 * n_pad * fp_in * fp_out), transcendentals=0,
            bytes_accessed=int(x_p.size * 2 + w.size * 2 + n_pad * fp_out * 2)),
    )(x_p, w)


def _agg_layer_call(a_p, h_p, weights, *, apply_w, fuse_mlp, out_dtype,
                    tm, tk, vmem_limit):
    n_pad = a_p.shape[0]
    fp_in = h_p.shape[1]                                   # aggregation width
    fp_hidden = weights[0].shape[1]                        # width after W / of b
    fp_out = weights[-2].shape[1] if fuse_mlp else fp_hidden
    grid = (n_pad // tm, n_pad // tk)

    # Resident h: one VMEM copy (constant index_map), sliced in-kernel. Budget
    # conservatively for double-buffered allocation.
    h_bytes = int(h_p.size) * h_p.dtype.itemsize
    h_resident = grid[1] > 1 and (2 * h_bytes) <= (vmem_limit // 2)
    if h_resident:
        h_spec = pl.BlockSpec((n_pad, fp_in), lambda i, k: (0, 0))
    else:
        h_spec = pl.BlockSpec((tk, fp_in), lambda i, k: (k, 0))

    # Weights / biases resident across the whole grid.
    weight_specs = [pl.BlockSpec(w.shape, lambda i, k: (0, 0)) for w in weights]

    flops = 2 * n_pad * n_pad * fp_in
    if apply_w:
        flops += 2 * n_pad * fp_in * fp_hidden
    if fuse_mlp:
        flops += 2 * n_pad * fp_hidden * fp_out
    h_reads = 1 if (h_resident or grid[1] == 1) else grid[0]
    bytes_acc = (int(a_p.size) * a_p.dtype.itemsize
                 + h_bytes * h_reads
                 + sum(int(w.size) * w.dtype.itemsize for w in weights)
                 + n_pad * fp_out * jnp.dtype(out_dtype).itemsize)

    kernel = _make_agg_kernel(apply_w, fuse_mlp, h_resident, tk)

    return pl.pallas_call(
        kernel,
        out_shape=jax.ShapeDtypeStruct((n_pad, fp_out), out_dtype),
        grid=grid,
        in_specs=[pl.BlockSpec((tm, tk), lambda i, k: (i, k)),   # A_hat stream
                  h_spec,
                  *weight_specs],
        out_specs=pl.BlockSpec((tm, fp_out), lambda i, k: (i, 0)),
        scratch_shapes=[pltpu.VMEM((tm, fp_in), jnp.float32)],
        compiler_params=pltpu.CompilerParams(
            dimension_semantics=("parallel", "arbitrary"),
            vmem_limit_bytes=vmem_limit),
        cost_estimate=pl.CostEstimate(flops=int(flops), transcendentals=0,
                                      bytes_accessed=int(bytes_acc)),
    )(a_p, h_p, *weights)


def gcn_forward(params, a_norm, x, num_classes):
    n = a_norm.shape[0]
    n_pad, tm, tk = _choose_tiles(n)
    vmem_limit = _vmem_limit_bytes()

    h_feats = params["convs"][0]["w"].shape[1]
    fp_hid = _round_up(h_feats, LANE)
    fp_in = _round_up(x.shape[1], LANE)
    fp_cls = _round_up(num_classes, LANE)

    a_p = _pad2(a_norm, n_pad, n_pad, jnp.bfloat16)
    h = _pad2(x, n_pad, fp_in, jnp.bfloat16)

    convs = params["convs"]
    wo = _pad2(params["w_out"], fp_hid, fp_cls, jnp.bfloat16)
    bo = _pad2(params["b_out"], 1, fp_cls, jnp.bfloat16)

    for li, lp in enumerate(convs):
        fp_prev = h.shape[1]
        w = _pad2(lp["w"], fp_prev, fp_hid, jnp.bfloat16)
        b = _pad2(lp["b"], 1, fp_hid, jnp.bfloat16)
        is_last = li == len(convs) - 1
        out_dtype = jnp.float32 if is_last else jnp.bfloat16

        if fp_prev > fp_hid:
            # wide input features: project first (small matmul), aggregate at
            # the narrow hidden width.
            hw = _project_call(h, w, tm, vmem_limit)
            weights = (b, wo, bo) if is_last else (b,)
            h = _agg_layer_call(a_p, hw, weights, apply_w=False,
                                fuse_mlp=is_last, out_dtype=out_dtype,
                                tm=tm, tk=tk, vmem_limit=vmem_limit)
        else:
            weights = (w, b, wo, bo) if is_last else (w, b)
            h = _agg_layer_call(a_p, h, weights, apply_w=True,
                                fuse_mlp=is_last, out_dtype=out_dtype,
                                tm=tm, tk=tk, vmem_limit=vmem_limit)

    return h[:n, :num_classes]


# ---------------------------------------------------------------------------
# Parameter init (GraphConv: xavier_uniform weight, zero bias; MLP: uniform)
# ---------------------------------------------------------------------------

def init_gcn_params(key, in_feats, h_feats, num_classes, num_layers):
    params = {"convs": []}
    last = in_feats
    for _ in range(num_layers):
        key, kw = jax.random.split(key)
        bound = math.sqrt(6.0 / (last + h_feats))
        w = jax.random.uniform(kw, (last, h_feats), jnp.float32, -bound, bound)
        b = jnp.zeros((1, h_feats), jnp.float32)
        params["convs"].append({"w": w, "b": b})
        last = h_feats
    key, kw, kb = jax.random.split(key, 3)
    bound = 1.0 / math.sqrt(h_feats)
    params["w_out"] = jax.random.uniform(kw, (h_feats, num_classes),
                                         jnp.float32, -bound, bound)
    params["b_out"] = jax.random.uniform(kb, (1, num_classes),
                                         jnp.float32, -bound, bound)
    return params


# ---------------------------------------------------------------------------
# Pure-JAX reference (mirrors the kernels' bf16 rounding points & layer order)
# ---------------------------------------------------------------------------

def gcn_reference(params, a_norm, x, h_feats):
    hp = jax.lax.Precision.HIGHEST
    bf = lambda v: v.astype(jnp.bfloat16).astype(jnp.float32)
    fp_hid = _round_up(h_feats, LANE)
    a = bf(a_norm)
    h = bf(x)
    convs = params["convs"]
    for i, lp in enumerate(convs):
        w, b = bf(lp["w"]), bf(lp["b"])
        if _round_up(h.shape[1], LANE) > fp_hid:          # project-then-aggregate
            hw = bf(jnp.dot(h, w, precision=hp))
            z = jnp.dot(a, hw, precision=hp) + b
        else:                                             # aggregate-then-project
            agg = bf(jnp.dot(a, h, precision=hp))
            z = jnp.dot(agg, w, precision=hp) + b
        h = jnp.maximum(z, 0.0)
        if i < len(convs) - 1:
            h = bf(h)                                     # stored bf16 between kernels
    return (jnp.dot(bf(h), bf(params["w_out"]), precision=hp)
            + bf(params["b_out"]))


# ---------------------------------------------------------------------------
# Main
# ---------------------------------------------------------------------------

def _make_graph(key, n, in_feats, p=0.3):
    k_feat, k_adj = jax.random.split(key)
    x = jax.random.normal(k_feat, (n, in_feats), jnp.float32)
    # deterministic random directed graph; A[v,u] = 1 iff edge u -> v, with
    # self-loops so every node has in-degree >= 1 (GraphConv requirement)
    adj = (jax.random.uniform(k_adj, (n, n)) < p).astype(jnp.float32)
    adj = jnp.maximum(adj, jnp.eye(n, dtype=jnp.float32))
    deg_in = adj.sum(axis=1)
    deg_out = adj.sum(axis=0)
    a_norm = (adj / jnp.sqrt(jnp.maximum(deg_in, 1.0))[:, None]
                  / jnp.sqrt(jnp.maximum(deg_out, 1.0))[None, :])
    return x, a_norm


if __name__ == "__main__":
    H_FEATS = 32
    NUM_CLASSES = 2
    NUM_LAYERS = 2   # GraphConv layers; mlp_layers = 1

    key = jax.random.PRNGKey(0)

    # (N, in_feats): toy config + a config that exercises multi-step row/K
    # tiling, the resident-h slicing path and project-then-aggregate.
    for n, in_feats in ((16, 8), (700, 200)):
        key, k_graph, k_param = jax.random.split(key, 3)
        x, a_norm = _make_graph(k_graph, n, in_feats)
        params = init_gcn_params(k_param, in_feats, H_FEATS, NUM_CLASSES,
                                 NUM_LAYERS)

        out = jax.block_until_ready(gcn_forward(params, a_norm, x, NUM_CLASSES))
        assert out.shape == (n, NUM_CLASSES), out.shape

        ref = gcn_reference(params, a_norm, x, H_FEATS)
        err = float(jnp.max(jnp.abs(out - ref)))
        assert err < 5e-2, (n, in_feats, err)

    print("KERNEL_OK")
</pallas_src>

<mosaic_0001>
module attributes {stable_mosaic.version = 11 : i64} {
  func.func @kernel(%arg0: i32, %arg1: i32, %arg2: memref<128x256xbf16, #tpu.memory_space<vmem>>, %arg3: memref<256x128xbf16, #tpu.memory_space<vmem>>, %arg4: memref<128x128xbf16, #tpu.memory_space<vmem>>, %arg5: memref<1x128xbf16, #tpu.memory_space<vmem>>, %arg6: memref<128x128xbf16, #tpu.memory_space<vmem>>, %arg7: memref<128x128xf32, #tpu.memory_space<vmem>>) attributes {dimension_semantics = [#tpu.dimension_semantics<parallel>, #tpu.dimension_semantics<arbitrary>], iteration_bounds = array<i64: 2, 1>, scalar_prefetch = 0 : i64, scratch_operands = 1 : i64, tpu.core_type = #tpu.core_type<tc>, window_params = [{transform_indices = @transform_0, window_bounds = array<i64: 128, 256>}, {transform_indices = @transform_1, window_bounds = array<i64: 256, 128>}, {pipeline_mode = #tpu.pipeline_mode<synchronous>, transform_indices = @transform_2, window_bounds = array<i64: 128, 128>}, {pipeline_mode = #tpu.pipeline_mode<synchronous>, transform_indices = @transform_3, window_bounds = array<i64: 1, 128>}, {transform_indices = @transform_4, window_bounds = array<i64: 128, 128>}]} {
    %c0_i32 = arith.constant 0 : i32
    %0 = arith.cmpi eq, %arg1, %c0_i32 : i32
    %1 = arith.extui %0 : i1 to i32
    %c0_i32_0 = arith.constant 0 : i32
    %2 = arith.cmpi ne, %1, %c0_i32_0 : i32
    scf.if %2 {
      %cst_10 = arith.constant 0.000000e+00 : f32
      %12 = vector.broadcast %cst_10 : f32 to vector<128x128xf32>
      %c0_11 = arith.constant 0 : index
      %c0_12 = arith.constant 0 : index
      %13 = vector.load %arg7[%c0_11, %c0_12] : memref<128x128xf32, #tpu.memory_space<vmem>>, vector<128x128xf32>
      tpu.vector_store %arg7[%c0_11, %c0_12], %12 {strides = array<i32>} : memref<128x128xf32, #tpu.memory_space<vmem>>, vector<128x128xf32>,
    } else {
    }
    %c0 = arith.constant 0 : index
    %c0_1 = arith.constant 0 : index
    %3 = vector.load %arg3[%c0, %c0_1] : memref<256x128xbf16, #tpu.memory_space<vmem>>, vector<256x128xbf16>
    %c0_2 = arith.constant 0 : index
    %c0_3 = arith.constant 0 : index
    %4 = vector.load %arg7[%c0_2, %c0_3] : memref<128x128xf32, #tpu.memory_space<vmem>>, vector<128x128xf32>
    %c0_4 = arith.constant 0 : index
    %c0_5 = arith.constant 0 : index
    %5 = vector.load %arg2[%c0_4, %c0_5] : memref<128x256xbf16, #tpu.memory_space<vmem>>, vector<128x256xbf16>
    %cst = arith.constant dense<0.000000e+00> : vector<128x128xf32>
    %6 = tpu.matmul %5, %3, %cst {dimension_numbers = #tpu.dot_dimension_numbers<[1], [0], [0], [1], [0, 0, 1, 1], [], []>} : vector<128x256xbf16>, vector<256x128xbf16>, vector<128x128xf32> -> vector<128x128xf32>
    %7 = arith.addf %4, %6 : vector<128x128xf32>
    %c0_6 = arith.constant 0 : index
    %c0_7 = arith.constant 0 : index
    %8 = vector.load %arg7[%c0_6, %c0_7] : memref<128x128xf32, #tpu.memory_space<vmem>>, vector<128x128xf32>
    tpu.vector_store %arg7[%c0_6, %c0_7], %7 {strides = array<i32>} : memref<128x128xf32, #tpu.memory_space<vmem>>, vector<128x128xf32>,
    %c0_i32_8 = arith.constant 0 : i32
    %9 = arith.cmpi eq, %arg1, %c0_i32_8 : i32
    %10 = arith.extui %9 : i1 to i32
    %c0_i32_9 = arith.constant 0 : i32
    %11 = arith.cmpi ne, %10, %c0_i32_9 : i32
    scf.if %11 {
      %c0_10 = arith.constant 0 : index
      %c0_11 = arith.constant 0 : index
      %12 = vector.load %arg7[%c0_10, %c0_11] : memref<128x128xf32, #tpu.memory_space<vmem>>, vector<128x128xf32>
      %13 = arith.truncf %12 : vector<128x128xf32> to vector<128x128xbf16>
      %c0_12 = arith.constant 0 : index
      %c0_13 = arith.constant 0 : index
      %14 = vector.load %arg4[%c0_12, %c0_13] : memref<128x128xbf16, #tpu.memory_space<vmem>>, vector<128x128xbf16>
      %cst_14 = arith.constant dense<0.000000e+00> : vector<128x128xf32>
      %15 = tpu.matmul %13, %14, %cst_14 {dimension_numbers = #tpu.dot_dimension_numbers<[1], [0], [0], [1], [0, 0, 1, 1], [], []>} : vector<128x128xbf16>, vector<128x128xbf16>, vector<128x128xf32> -> vector<128x128xf32>
      %c0_15 = arith.constant 0 : index
      %c0_16 = arith.constant 0 : index
      %16 = vector.load %arg5[%c0_15, %c0_16] : memref<1x128xbf16, #tpu.memory_space<vmem>>, vector<1x128xbf16>
      %17 = arith.extf %16 : vector<1x128xbf16> to vector<1x128xf32>
      %18 = vector.broadcast %17 : vector<1x128xf32> to vector<128x128xf32>
      %19 = arith.addf %15, %18 : vector<128x128xf32>
      %cst_17 = arith.constant 0.000000e+00 : f32
      %20 = vector.broadcast %cst_17 : f32 to vector<128x128xf32>
      %21 = arith.maximumf %19, %20 : vector<128x128xf32>
      %22 = arith.truncf %21 : vector<128x128xf32> to vector<128x128xbf16>
      %c0_18 = arith.constant 0 : index
      %c0_19 = arith.constant 0 : index
      %23 = vector.load %arg6[%c0_18, %c0_19] : memref<128x128xbf16, #tpu.memory_space<vmem>>, vector<128x128xbf16>
      tpu.vector_store %arg6[%c0_18, %c0_19], %22 {strides = array<i32>} : memref<128x128xbf16, #tpu.memory_space<vmem>>, vector<128x128xbf16>,
    } else {
    }
    return
  }
  func.func @transform_0(%arg0: i32, %arg1: i32) -> (i32, i32) {
    %c0_i32 = arith.constant 0 : i32
    return %arg0, %arg1 : i32, i32
  }
  func.func @transform_1(%arg0: i32, %arg1: i32) -> (i32, i32) {
    %c0_i32 = arith.constant 0 : i32
    %c0_i32_0 = arith.constant 0 : i32
    return %arg1, %c0_i32 : i32, i32
  }
  func.func @transform_2(%arg0: i32, %arg1: i32) -> (i32, i32) {
    %c0_i32 = arith.constant 0 : i32
    %c0_i32_0 = arith.constant 0 : i32
    %c0_i32_1 = arith.constant 0 : i32
    return %c0_i32, %c0_i32_0 : i32, i32
  }
  func.func @transform_3(%arg0: i32, %arg1: i32) -> (i32, i32) {
    %c0_i32 = arith.constant 0 : i32
    %c0_i32_0 = arith.constant 0 : i32
    %c0_i32_1 = arith.constant 0 : i32
    return %c0_i32, %c0_i32_0 : i32, i32
  }
  func.func @transform_4(%arg0: i32, %arg1: i32) -> (i32, i32) {
    %c0_i32 = arith.constant 0 : i32
    %c0_i32_0 = arith.constant 0 : i32
    return %arg0, %c0_i32 : i32, i32
  }
}

</mosaic_0001>

<llo_original>
// kernel: tpu_custom_call.1
$region0: #{tpu_custom_call.1}
  #allocation0 [shape = 'u32[]', space=smem, size = 0x4, offset = 0x4, fixed_abs, tag = 'smem constant byte address 0x4 - core index']
  #allocation1 [shape = 'u32[72,128]{1,0:T(1,128)}', space=vmem, size = 0x9000, scoped, tag = 'internal scratch']
  #allocation2 [shape = 'f32[128,128]{1,0:T(8,128)}', space=vmem, size = 0x10000, scoped, tag = 'scratch operand']
  %s0 = inlined_call_operand.hbm [shape: bf16[256,256], index: 0, kind: input, shape index: {}]
  %s1 = inlined_call_operand.hbm [shape: bf16[256,128], index: 1, kind: input, shape index: {}]
  %s2 = inlined_call_operand.hbm [shape: bf16[128,128], index: 2, kind: input, shape index: {}]
  %s3 = inlined_call_operand.vmem [shape: bf16[1,128], index: 3, kind: input, shape index: {}]
  %s4 = inlined_call_operand.hbm [shape: bf16[256,128], index: 4, kind: output, shape index: {}]
  %s5 = sld [smem:[#allocation0]]
  $region69: #{tpu_custom_call.1} parent=0
    _
  %s7 = ssub.s32 1, %s5
  %s8 = scalar_select 0, %s7, %s5
  $region1: #{tpu_custom_call.1} parent=0
    #allocation3 [shape = 'u8[131072]{0}', space=vmem, size = 0x20000, scoped, tag = 'input window, operand 0']
    #allocation4 [shape = 's32[2]{0}', space=sflag, size = 0x8, scoped, tag = 'scoped memory for tpu_custom_call.1']
    #allocation5 [shape = 's32[2]{0}', space=sflag, size = 0x8, scoped, tag = 'scoped memory for tpu_custom_call.1']
    #allocation6 [shape = 'u8[65536]{0}', space=vmem, size = 0x10000, scoped, tag = 'input window, operand 1, single buffered']
    #allocation7 [shape = 's32[1]{0}', space=sflag, size = 0x4, scoped, tag = 'scoped memory for tpu_custom_call.1']
    #allocation8 [shape = 'u8[32768]{0}', space=vmem, size = 0x8000, scoped, tag = 'input window, operand 2, single buffered']
    #allocation9 [shape = 'u8[65536]{0}', space=vmem, size = 0x10000, scoped, tag = 'output window, operand 0']
    %9 = vsyncpa [#allocation4], 0
    %s10 = scalar_lea.sflag [#allocation4], 1
    %11 = vsyncpa %s10, 0
    %12 = vsyncpa [#allocation7], 0
    %13 = vsyncpa [#allocation5], 0
    %s14 = scalar_lea.sflag [#allocation5], 1
    %15 = vsyncpa %s14, 0
    loop: start=0, step=1, limit=4
    $region2: #{tpu_custom_call.1} parent=1 // loop_pre_header
      _
    $region3: #{tpu_custom_call.1} parent=1 // loop_header
      %s17 = sphi 0, %s21
      %p18 = scmp.ge.s32.totalorder %s17, 4
      %s24 = sphi 0, %s36
      %s25 = sphi 0, %s32
      %s26 = sphi 0, %s24
      %s27 = sphi 0, %s25
      %s28 = sphi 0, %s26
      %s29 = sphi 0, %s27
      %s41 = sphi 0, %s43
      %s44 = sphi 0, %s41
      %s45 = sphi 0, %s44
      %s61 = sphi 0, %s45
      %s67 = sphi 0, %s69
      %s70 = sphi 0, %s67
      %s71 = sphi 0, %s70
      %s87 = sphi 0, %s71
      %s91 = sphi 0, %s91
      %s93 = sphi 0, %s91
      %s94 = sphi 0, %s93
      %s108 = sphi 0, %s94
      %s112 = sphi 0, %s112
      %s114 = sphi 0, %s112
      %s115 = sphi 0, %s114
      %s129 = sphi 0, %s115
      %s135 = sphi 0, %s137
      %s138 = sphi 0, %s135
      %s139 = sphi 0, %s138
      %s155 = sphi 0, %s139
    $region4: #{tpu_custom_call.1} parent=1 // loop_header_branch
      %20 = sbr.rel (%p18) target = $region8
    $region5: #{tpu_custom_call.1} parent=1 // loop_body
      %s22 = ssub.s32 %s17, 1
      %s23 = ssub.s32 %s17, 2
      %s30 = sadd.s32 1, %s25
      %p31 = scmp.ge.s32.totalorder %s30, 1
      %s32 = scalar_select %p31, 0, %s30
      %s33 = sadd.s32 1, %s24
      %s34 = scalar_select %p31, %s33, %s24
      %p35 = scmp.ge.s32.totalorder %s34, 2
      %s36 = scalar_select %p35, 0, %s34
      %s37 = ssub.s32 %s24, %s36
      %s38 = ssub.s32 %s25, %s32
      %s39 = sor.u32 %s37, %s38
      %p40 = scmp.eq.s32.totalorder %s39, 0
      %s42 = sadd.s32 %s41, 1
      %s43 = scalar_select %p40, %s41, %s42
      %p46 = pneg %p40
      %p47 = scmp.eq.s32.totalorder %s17, 1
      %p48 = por %p46, %p47
      %p49 = scmp.ne.s32.totalorder %s41, %s44
      %p50 = scmp.eq.s32.totalorder %s17, 0
      %p51 = por %p49, %p50
      %p52 = scmp.ne.s32.totalorder %s41, %s44
      %p53 = scmp.eq.s32.totalorder %s22, 1
      %p54 = por %p52, %p53
      %p55 = scmp.ne.s32.totalorder %s44, %s45
      %p56 = scmp.eq.s32.totalorder %s22, 0
      %p57 = por %p55, %p56
      %p58 = scmp.ne.s32.totalorder %s44, %s45
      %p59 = scmp.eq.s32.totalorder %s23, 1
      %p60 = por %p58, %p59
      %p62 = scmp.ne.s32.totalorder %s45, %s61
      %p63 = scmp.eq.s32.totalorder %s23, 0
      %p64 = por %p62, %p63
      %s65 = ssub.s32 %s25, %s32
      %p66 = scmp.eq.s32.totalorder %s65, 0
      %s68 = sadd.s32 %s67, 1
      %s69 = scalar_select %p66, %s67, %s68
      %p72 = pneg %p66
      %p73 = scmp.eq.s32.totalorder %s17, 1
      %p74 = por %p72, %p73
      %p75 = scmp.ne.s32.totalorder %s67, %s70
      %p76 = scmp.eq.s32.totalorder %s17, 0
      %p77 = por %p75, %p76
      %p78 = scmp.ne.s32.totalorder %s67, %s70
      %p79 = scmp.eq.s32.totalorder %s22, 1
      %p80 = por %p78, %p79
      %p81 = scmp.ne.s32.totalorder %s70, %s71
      %p82 = scmp.eq.s32.totalorder %s22, 0
      %p83 = por %p81, %p82
      %p84 = scmp.ne.s32.totalorder %s70, %s71
      %p85 = scmp.eq.s32.totalorder %s23, 1
      %p86 = por %p84, %p85
      %p88 = scmp.ne.s32.totalorder %s71, %s87
      %p89 = scmp.eq.s32.totalorder %s23, 0
      %p90 = por %p88, %p89
      %s92 = sadd.s32 %s91, 1
      %p95 = scmp.eq.s32.totalorder %s17, 1
      %p96 = scmp.ne.s32.totalorder %s91, %s93
      %p97 = scmp.eq.s32.totalorder %s17, 0
      %p98 = por %p96, %p97
      %p99 = scmp.ne.s32.totalorder %s91, %s93
      %p100 = scmp.eq.s32.totalorder %s22, 1
      %p101 = por %p99, %p100
      %p102 = scmp.ne.s32.totalorder %s93, %s94
      %p103 = scmp.eq.s32.totalorder %s22, 0
      %p104 = por %p102, %p103
      %p105 = scmp.ne.s32.totalorder %s93, %s94
      %p106 = scmp.eq.s32.totalorder %s23, 1
      %p107 = por %p105, %p106
      %p109 = scmp.ne.s32.totalorder %s94, %s108
      %p110 = scmp.eq.s32.totalorder %s23, 0
      %p111 = por %p109, %p110
      %s113 = sadd.s32 %s112, 1
      %p116 = scmp.eq.s32.totalorder %s17, 1
      %p117 = scmp.ne.s32.totalorder %s112, %s114
      %p118 = scmp.eq.s32.totalorder %s17, 0
      %p119 = por %p117, %p118
      %p120 = scmp.ne.s32.totalorder %s112, %s114
      %p121 = scmp.eq.s32.totalorder %s22, 1
      %p122 = por %p120, %p121
      %p123 = scmp.ne.s32.totalorder %s114, %s115
      %p124 = scmp.eq.s32.totalorder %s22, 0
      %p125 = por %p123, %p124
      %p126 = scmp.ne.s32.totalorder %s114, %s115
      %p127 = scmp.eq.s32.totalorder %s23, 1
      %p128 = por %p126, %p127
      %p130 = scmp.ne.s32.totalorder %s115, %s129
      %p131 = scmp.eq.s32.totalorder %s23, 0
      %p132 = por %p130, %p131
      %s133 = ssub.s32 %s24, %s36
      %p134 = scmp.eq.s32.totalorder %s133, 0
      %s136 = sadd.s32 %s135, 1
      %s137 = scalar_select %p134, %s135, %s136
      %p140 = pneg %p134
      %p141 = scmp.eq.s32.totalorder %s17, 1
      %p142 = por %p140, %p141
      %p143 = scmp.ne.s32.totalorder %s135, %s138
      %p144 = scmp.eq.s32.totalorder %s17, 0
      %p145 = por %p143, %p144
      %p146 = scmp.ne.s32.totalorder %s135, %s138
      %p147 = scmp.eq.s32.totalorder %s22, 1
      %p148 = por %p146, %p147
      %p149 = scmp.ne.s32.totalorder %s138, %s139
      %p150 = scmp.eq.s32.totalorder %s22, 0
      %p151 = por %p149, %p150
      %p152 = scmp.ne.s32.totalorder %s138, %s139
      %p153 = scmp.eq.s32.totalorder %s23, 1
      %p154 = por %p152, %p153
      %p156 = scmp.ne.s32.totalorder %s139, %s155
      %p157 = scmp.eq.s32.totalorder %s23, 0
      %p158 = por %p156, %p157
      %p159 = scmp.le.s32.totalorder 1, %s17
      %p160 = scmp.lt.s32.totalorder %s17, 3
      %p161 = pnand %p159, %p160
      %p162 = pneg %p161
      // Predicated region
      $region9: #{tpu_custom_call.1} parent=5 // pred_check
        _
      $region10: #{tpu_custom_call.1} parent=5 // pred_check_branch
        %164 = sbr.rel (%p161) target = $region12
      $region11: #{tpu_custom_call.1} parent=5 // pred_region
        %s165 = ssub.s32 %s17, 1
        // Predicated region
        $region13: #{tpu_custom_call.1} parent=11 // pred_check
          %p166 = pneg %p83
        $region14: #{tpu_custom_call.1} parent=11 // pred_check_branch
          %168 = sbr.rel (%p166) target = $region16
        $region15: #{tpu_custom_call.1} parent=11 // pred_region
          %s169 = smul.u32 32, %s27
          %171 = vsyncadd [#allocation7], 0
          %s172 = smul.addr %s169, 4
          %s173 = scalar_lea.hbm %s1, %s172
          %s174 = sshll.u32 %s173, 4
          %s175 = int_to_ptr.hbm [resolvable:$true] %s174
          %s176 = sshll.u32 [#allocation6], 4
          %s177 = int_to_ptr.vmem [resolvable:$true] %s176
          %182 = dma.hbm_to_vmem [thread:$0]  %s175, 2048, %s177, [#allocation7], 64, 64, 4
        $region16: #{tpu_custom_call.1} parent=11 // pred_fallthru
          _
        // Predicated region
        $region17: #{tpu_custom_call.1} parent=11 // pred_check
          %p183 = pneg %p104
        $region18: #{tpu_custom_call.1} parent=11 // pred_check_branch
          %185 = sbr.rel (%p183) target = $region20
        $region19: #{tpu_custom_call.1} parent=11 // pred_region
          %187 = vsyncadd [#allocation7], 0
          %s188 = sshll.u32 %s2, 4
          %s189 = int_to_ptr.hbm [resolvable:$true] %s188
          %s190 = sshll.u32 [#allocation8], 4
          %s191 = int_to_ptr.vmem [resolvable:$true] %s190
          %196 = dma.hbm_to_vmem [thread:$0]  %s189, 1024, %s191, [#allocation7], 64, 64, 4
        $region20: #{tpu_custom_call.1} parent=11 // pred_fallthru
          _
        // Predicated region
        $region21: #{tpu_custom_call.1} parent=11 // pred_check
          %p197 = pneg %p125
        $region22: #{tpu_custom_call.1} parent=11 // pred_check_branch
          %199 = sbr.rel (%p197) target = $region24
        $region23: #{tpu_custom_call.1} parent=11 // pred_region
          _
        $region24: #{tpu_custom_call.1} parent=11 // pred_fallthru
          _
      $region12: #{tpu_custom_call.1} parent=5 // pred_fallthru
        _
      %p200 = scmp.lt.s32.totalorder %s17, 2
      // Predicated region
      $region25: #{tpu_custom_call.1} parent=5 // pred_check
        %p201 = pneg %p200
      $region26: #{tpu_custom_call.1} parent=5 // pred_check_branch
        %203 = sbr.rel (%p201) target = $region28
      $region27: #{tpu_custom_call.1} parent=5 // pred_region
        // Predicated region
        $region29: #{tpu_custom_call.1} parent=27 // pred_check
          %p204 = pneg %p51
        $region30: #{tpu_custom_call.1} parent=27 // pred_check_branch
          %206 = sbr.rel (%p204) target = $region32
        $region31: #{tpu_custom_call.1} parent=27 // pred_region
          %s207 = sand.u32 %s41, 1
          %s208 = scalar_lea.sflag [#allocation4], %s207
          %s209 = sand.u32 %s41, 1
          %s210 = smul.addr %s209, 128
          %s211 = scalar_lea.vmem [#allocation3], %s210
          %s212 = smul.u32 16, %s24
          %s213 = smul.u32 2, %s25
          %215 = vsyncadd %s208, 0
          %s216 = smul.addr %s212, 2
          %s217 = sadd.s32 %s213, %s216
          %s218 = smul.addr %s217, 4
          %s219 = scalar_lea.hbm %s0, %s218
          %s220 = sshll.u32 %s219, 4
          %s221 = int_to_ptr.hbm [resolvable:$true] %s220
          %s222 = sshll.u32 %s211, 4
          %s223 = int_to_ptr.vmem [resolvable:$true] %s222
          %228 = dma.hbm_to_vmem [thread:$0]  %s221, 2048, %s223, %s208, 128, 128, 8
        $region32: #{tpu_custom_call.1} parent=27 // pred_fallthru
          _
      $region28: #{tpu_custom_call.1} parent=5 // pred_fallthru
        _
      %p229 = scmp.le.s32.totalorder 1, %s17
      %p230 = scmp.lt.s32.totalorder %s17, 3
      %p231 = pnand %p229, %p230
      %p232 = pneg %p231
      // Predicated region
      $region33: #{tpu_custom_call.1} parent=5 // pred_check
        _
      $region34: #{tpu_custom_call.1} parent=5 // pred_check_branch
        %234 = sbr.rel (%p231) target = $region36
      $region35: #{tpu_custom_call.1} parent=5 // pred_region
        %s235 = ssub.s32 %s17, 1
        %s236 = sand.u32 %s44, 1
        %s237 = scalar_lea.sflag [#allocation4], %s236
        %s238 = sand.u32 %s44, 1
        %s239 = smul.addr %s238, 128
        %s240 = scalar_lea.vmem [#allocation3], %s239
        // Predicated region
        $region37: #{tpu_custom_call.1} parent=35 // pred_check
          %p241 = pneg %p57
        $region38: #{tpu_custom_call.1} parent=35 // pred_check_branch
          %243 = sbr.rel (%p241) target = $region40
        $region39: #{tpu_custom_call.1} parent=35 // pred_region
          %245 = dma.done %s237, 2048
        $region40: #{tpu_custom_call.1} parent=35 // pred_fallthru
          _
        // Predicated region
        $region41: #{tpu_custom_call.1} parent=35 // pred_check
          %p246 = pneg %p83
        $region42: #{tpu_custom_call.1} parent=35 // pred_check_branch
          %248 = sbr.rel (%p246) target = $region44
        $region43: #{tpu_custom_call.1} parent=35 // pred_region
          %250 = dma.done [#allocation7], 2048
        $region44: #{tpu_custom_call.1} parent=35 // pred_fallthru
          _
        // Predicated region
        $region45: #{tpu_custom_call.1} parent=35 // pred_check
          %p251 = pneg %p104
        $region46: #{tpu_custom_call.1} parent=35 // pred_check_branch
          %253 = sbr.rel (%p251) target = $region48
        $region47: #{tpu_custom_call.1} parent=35 // pred_region
          %255 = dma.done [#allocation7], 1024
        $region48: #{tpu_custom_call.1} parent=35 // pred_fallthru
          _
        %s256 = sand.u32 %s44, 1
        %s257 = scalar_lea.sflag [#allocation4], %s256
        %s258 = sand.u32 %s44, 1
        %s259 = smul.addr %s258, 128
        %s260 = scalar_lea.vmem [#allocation3], %s259
        %p261 = pneg %p57
        %p262 = pneg %p54
        %p263 = pneg %p83
        %p264 = pneg %p80
        %p265 = pneg %p104
        %p266 = pneg %p101
        %p267 = pneg %p125
        %p268 = pneg %p122
        %p269 = pneg %p151
        %p270 = pneg %p148
        %s271 = sand.u32 %s138, 1
        %s272 = scalar_lea.sflag [#allocation5], %s271
        %s273 = sand.u32 %s138, 1
        %s274 = smul.addr %s273, 64
        %s275 = scalar_lea.vmem [#allocation9], %s274
        %s276 = smul.u32 16, %s26
        %s277 = smul.u32 2, %s27
        %s278 = smul.u32 32, %s27
        %s279 = smul.u32 16, %s26
        %p280 = scmp.eq.s32.totalorder %s27, 0
        // Predicated region
        $region49: #{tpu_custom_call.1} parent=35 // pred_check
          %p281 = pneg %p280
        $region50: #{tpu_custom_call.1} parent=35 // pred_check_branch
          %283 = sbr.rel (%p281) target = $region52
        $region51: #{tpu_custom_call.1} parent=35 // pred_region
          %284 = vst [vmem:[#allocation2] sm:$0xff] 0.0
          %285 = vst [vmem:[#allocation2 + $0x8] sm:$0xff] 0.0
          %286 = vst [vmem:[#allocation2 + $0x10] sm:$0xff] 0.0
          %287 = vst [vmem:[#allocation2 + $0x18] sm:$0xff] 0.0
          %288 = vst [vmem:[#allocation2 + $0x20] sm:$0xff] 0.0
          %289 = vst [vmem:[#allocation2 + $0x28] sm:$0xff] 0.0
          %290 = vst [vmem:[#allocation2 + $0x30] sm:$0xff] 0.0
          %291 = vst [vmem:[#allocation2 + $0x38] sm:$0xff] 0.0
          %292 = vst [vmem:[#allocation2 + $0x40] sm:$0xff] 0.0
          %293 = vst [vmem:[#allocation2 + $0x48] sm:$0xff] 0.0
          %294 = vst [vmem:[#allocation2 + $0x50] sm:$0xff] 0.0
          %295 = vst [vmem:[#allocation2 + $0x58] sm:$0xff] 0.0
          %296 = vst [vmem:[#allocation2 + $0x60] sm:$0xff] 0.0
          %297 = vst [vmem:[#allocation2 + $0x68] sm:$0xff] 0.0
          %298 = vst [vmem:[#allocation2 + $0x70] sm:$0xff] 0.0
          %299 = vst [vmem:[#allocation2 + $0x78] sm:$0xff] 0.0
        $region52: #{tpu_custom_call.1} parent=35 // pred_fallthru
          _
        %v300 = vld [vmem:[#allocation6] sm:$0xf]
        %v301 = vld [vmem:[#allocation6 + $0x4] sm:$0xf]
        %v302 = vld [vmem:[#allocation6 + $0x8] sm:$0xf]
        %v303 = vld [vmem:[#allocation6 + $0xc] sm:$0xf]
        %v304 = vld [vmem:[#allocation6 + $0x10] sm:$0xf]
        %v305 = vld [vmem:[#allocation6 + $0x14] sm:$0xf]
        %v306 = vld [vmem:[#allocation6 + $0x18] sm:$0xf]
        %v307 = vld [vmem:[#allocation6 + $0x1c] sm:$0xf]
        %v308 = vld [vmem:[#allocation6 + $0x20] sm:$0xf]
        %v309 = vld [vmem:[#allocation6 + $0x24] sm:$0xf]
        %v310 = vld [vmem:[#allocation6 + $0x28] sm:$0xf]
        %v311 = vld [vmem:[#allocation6 + $0x2c] sm:$0xf]
        %v312 = vld [vmem:[#allocation6 + $0x30] sm:$0xf]
        %v313 = vld [vmem:[#allocation6 + $0x34] sm:$0xf]
        %v314 = vld [vmem:[#allocation6 + $0x38] sm:$0xf]
        %v315 = vld [vmem:[#allocation6 + $0x3c] sm:$0xf]
        %v316 = vld [vmem:[#allocation6 + $0x40] sm:$0xf]
        %v317 = vld [vmem:[#allocation6 + $0x44] sm:$0xf]
        %v318 = vld [vmem:[#allocation6 + $0x48] sm:$0xf]
        %v319 = vld [vmem:[#allocation6 + $0x4c] sm:$0xf]
        %v320 = vld [vmem:[#allocation6 + $0x50] sm:$0xf]
        %v321 = vld [vmem:[#allocation6 + $0x54] sm:$0xf]
        %v322 = vld [vmem:[#allocation6 + $0x58] sm:$0xf]
        %v323 = vld [vmem:[#allocation6 + $0x5c] sm:$0xf]
        %v324 = vld [vmem:[#allocation6 + $0x60] sm:$0xf]
        %v325 = vld [vmem:[#allocation6 + $0x64] sm:$0xf]
        %v326 = vld [vmem:[#allocation6 + $0x68] sm:$0xf]
        %v327 = vld [vmem:[#allocation6 + $0x6c] sm:$0xf]
        %v328 = vld [vmem:[#allocation6 + $0x70] sm:$0xf]
        %v329 = vld [vmem:[#allocation6 + $0x74] sm:$0xf]
        %v330 = vld [vmem:[#allocation6 + $0x78] sm:$0xf]
        %v331 = vld [vmem:[#allocation6 + $0x7c] sm:$0xf]
        %v332 = vld [vmem:[#allocation2] sm:$0xff]
        %v333 = vld [vmem:[#allocation2 + $0x8] sm:$0xff]
        %v334 = vld [vmem:[#allocation2 + $0x10] sm:$0xff]
        %v335 = vld [vmem:[#allocation2 + $0x18] sm:$0xff]
        %v336 = vld [vmem:[#allocation2 + $0x20] sm:$0xff]
        %v337 = vld [vmem:[#allocation2 + $0x28] sm:$0xff]
        %v338 = vld [vmem:[#allocation2 + $0x30] sm:$0xff]
        %v339 = vld [vmem:[#allocation2 + $0x38] sm:$0xff]
        %v340 = vld [vmem:[#allocation2 + $0x40] sm:$0xff]
        %v341 = vld [vmem:[#allocation2 + $0x48] sm:$0xff]
        %v342 = vld [vmem:[#allocation2 + $0x50] sm:$0xff]
        %v343 = vld [vmem:[#allocation2 + $0x58] sm:$0xff]
        %v344 = vld [vmem:[#allocation2 + $0x60] sm:$0xff]
        %v345 = vld [vmem:[#allocation2 + $0x68] sm:$0xff]
        %v346 = vld [vmem:[#allocation2 + $0x70] sm:$0xff]
        %v347 = vld [vmem:[#allocation2 + $0x78] sm:$0xff]
        %v348 = vld [vmem:[%s240] sm:$0xff]
        %v349 = vld [vmem:[%s240 + $0x8] sm:$0xff]
        %v350 = vld [vmem:[%s240 + $0x10] sm:$0xff]
        %v351 = vld [vmem:[%s240 + $0x18] sm:$0xff]
        %v352 = vld [vmem:[%s240 + $0x20] sm:$0xff]
        %v353 = vld [vmem:[%s240 + $0x28] sm:$0xff]
        %v354 = vld [vmem:[%s240 + $0x30] sm:$0xff]
        %v355 = vld [vmem:[%s240 + $0x38] sm:$0xff]
        %v356 = vld [vmem:[%s240 + $0x40] sm:$0xff]
        %v357 = vld [vmem:[%s240 + $0x48] sm:$0xff]
        %v358 = vld [vmem:[%s240 + $0x50] sm:$0xff]
        %v359 = vld [vmem:[%s240 + $0x58] sm:$0xff]
        %v360 = vld [vmem:[%s240 + $0x60] sm:$0xff]
        %v361 = vld [vmem:[%s240 + $0x68] sm:$0xff]
        %v362 = vld [vmem:[%s240 + $0x70] sm:$0xff]
        %v363 = vld [vmem:[%s240 + $0x78] sm:$0xff]
        %v380 = vunpack.c.l.b16 %v348
        %v381 = vunpack.c.h.b16 %v348
        %v382 = vunpack.c.l.b16 %v349
        %v383 = vunpack.c.h.b16 %v349
        %v384 = vunpack.c.l.b16 %v350
        %v385 = vunpack.c.h.b16 %v350
        %v386 = vunpack.c.l.b16 %v351
        %v387 = vunpack.c.h.b16 %v351
        %v388 = vunpack.c.l.b16 %v352
        %v389 = vunpack.c.h.b16 %v352
        %v390 = vunpack.c.l.b16 %v353
        %v391 = vunpack.c.h.b16 %v353
        %v392 = vunpack.c.l.b16 %v354
        %v393 = vunpack.c.h.b16 %v354
        %v394 = vunpack.c.l.b16 %v355
        %v395 = vunpack.c.h.b16 %v355
        %v396 = vunpack.c.l.b16 %v356
        %v397 = vunpack.c.h.b16 %v356
        %v398 = vunpack.c.l.b16 %v357
        %v399 = vunpack.c.h.b16 %v357
        %v400 = vunpack.c.l.b16 %v358
        %v401 = vunpack.c.h.b16 %v358
        %v402 = vunpack.c.l.b16 %v359
        %v403 = vunpack.c.h.b16 %v359
        %v404 = vunpack.c.l.b16 %v360
        %v405 = vunpack.c.h.b16 %v360
        %v406 = vunpack.c.l.b16 %v361
        %v407 = vunpack.c.h.b16 %v361
        %v408 = vunpack.c.l.b16 %v362
        %v409 = vunpack.c.h.b16 %v362
        %v410 = vunpack.c.l.b16 %v363
        %v411 = vunpack.c.h.b16 %v363
        %v412 = vpack.c.b16 %v382, %v380
        %v413 = vpack.c.b16 %v383, %v381
        %v414 = vpack.c.b16 %v386, %v384
        %v415 = vpack.c.b16 %v387, %v385
        %v416 = vpack.c.b16 %v390, %v388
        %v417 = vpack.c.b16 %v391, %v389
        %v418 = vpack.c.b16 %v394, %v392
        %v419 = vpack.c.b16 %v395, %v393
        %v420 = vpack.c.b16 %v398, %v396
        %v421 = vpack.c.b16 %v399, %v397
        %v422 = vpack.c.b16 %v402, %v400
        %v423 = vpack.c.b16 %v403, %v401
        %v424 = vpack.c.b16 %v406, %v404
        %v425 = vpack.c.b16 %v407, %v405
        %v426 = vpack.c.b16 %v410, %v408
        %v427 = vpack.c.b16 %v411, %v409
        %v476 = vunpack.c.l.b16 %v300
        %v477 = vunpack.c.l.b16 %v301
        %v478 = vunpack.c.l.b16 %v302
        %v479 = vunpack.c.l.b16 %v303
        %v480 = vunpack.c.l.b16 %v304
        %v481 = vunpack.c.l.b16 %v305
        %v482 = vunpack.c.l.b16 %v306
        %v483 = vunpack.c.l.b16 %v307
        %v484 = vunpack.c.l.b16 %v308
        %v485 = vunpack.c.l.b16 %v309
        %v486 = vunpack.c.l.b16 %v310
        %v487 = vunpack.c.l.b16 %v311
        %v488 = vunpack.c.l.b16 %v312
        %v489 = vunpack.c.l.b16 %v313
        %v490 = vunpack.c.l.b16 %v314
        %v491 = vunpack.c.l.b16 %v315
        %v492 = vunpack.c.l.b16 %v316
        %v493 = vunpack.c.l.b16 %v317
        %v494 = vunpack.c.l.b16 %v318
        %v495 = vunpack.c.l.b16 %v319
        %v496 = vunpack.c.l.b16 %v320
        %v497 = vunpack.c.l.b16 %v321
        %v498 = vunpack.c.l.b16 %v322
        %v499 = vunpack.c.l.b16 %v323
        %v500 = vunpack.c.l.b16 %v324
        %v501 = vunpack.c.l.b16 %v325
        %v502 = vunpack.c.l.b16 %v326
        %v503 = vunpack.c.l.b16 %v327
        %v504 = vunpack.c.l.b16 %v328
        %v505 = vunpack.c.l.b16 %v329
        %v506 = vunpack.c.l.b16 %v330
        %v507 = vunpack.c.l.b16 %v331
        %v508 = vpack.c.b16 %v477, %v476
        %v509 = vpack.c.b16 %v479, %v478
        %v510 = vpack.c.b16 %v481, %v480
        %v511 = vpack.c.b16 %v483, %v482
        %v512 = vpack.c.b16 %v485, %v484
        %v513 = vpack.c.b16 %v487, %v486
        %v514 = vpack.c.b16 %v489, %v488
        %v515 = vpack.c.b16 %v491, %v490
        %v516 = vpack.c.b16 %v493, %v492
        %v517 = vpack.c.b16 %v495, %v494
        %v518 = vpack.c.b16 %v497, %v496
        %v519 = vpack.c.b16 %v499, %v498
        %v520 = vpack.c.b16 %v501, %v500
        %v521 = vpack.c.b16 %v503, %v502
        %v522 = vpack.c.b16 %v505, %v504
        %v523 = vpack.c.b16 %v507, %v506
        %540 = vmatpush.bf16.msra.mxu0 %v515
        %541 = vmatpush.bf16.msra.mxu0 %v514
        %542 = vmatpush.bf16.msra.mxu0 %v513
        %543 = vmatpush.bf16.msra.mxu0 %v512
        %544 = vmatpush.bf16.msra.mxu0 %v511
        %545 = vmatpush.bf16.msra.mxu0 %v510
        %546 = vmatpush.bf16.msra.mxu0 %v509
        %547 = vmatpush.bf16.msra.mxu0 %v508
        %548 = vmatmul.bf16.gmra.mxu0 %v412
        %v549 = vpop.f32.mrf.mxu0
        %v550 = vadd.f32 0.0, %v549
        %v551 = vpop.f32.mrf.mxu0
        %v552 = vadd.f32 0.0, %v551
        %553 = vmatmul.bf16.gmra.mxu0 %v414
        %v554 = vpop.f32.mrf.mxu0
        %v555 = vadd.f32 0.0, %v554
        %v556 = vpop.f32.mrf.mxu0
        %v557 = vadd.f32 0.0, %v556
        %558 = vmatmul.bf16.gmra.mxu0 %v416
        %v559 = vpop.f32.mrf.mxu0
        %v560 = vadd.f32 0.0, %v559
        %v561 = vpop.f32.mrf.mxu0
        %v562 = vadd.f32 0.0, %v561
        %563 = vmatmul.bf16.gmra.mxu0 %v418
        %v564 = vpop.f32.mrf.mxu0
        %v565 = vadd.f32 0.0, %v564
        %v566 = vpop.f32.mrf.mxu0
        %v567 = vadd.f32 0.0, %v566
        %568 = vmatmul.bf16.gmra.mxu0 %v420
        %v569 = vpop.f32.mrf.mxu0
        %v570 = vadd.f32 0.0, %v569
        %v571 = vpop.f32.mrf.mxu0
        %v572 = vadd.f32 0.0, %v571
        %573 = vmatmul.bf16.gmra.mxu0 %v422
        %v574 = vpop.f32.mrf.mxu0
        %v575 = vadd.f32 0.0, %v574
        %v576 = vpop.f32.mrf.mxu0
        %v577 = vadd.f32 0.0, %v576
        %578 = vmatmul.bf16.gmra.mxu0 %v424
        %v579 = vpop.f32.mrf.mxu0
        %v580 = vadd.f32 0.0, %v579
        %v581 = vpop.f32.mrf.mxu0
        %v582 = vadd.f32 0.0, %v581
        %583 = vmatmul.bf16.gmra.mxu0 %v426
        %v584 = vpop.f32.mrf.mxu0
        %v585 = vadd.f32 0.0, %v584
        %v586 = vpop.f32.mrf.mxu0
        %v587 = vadd.f32 0.0, %v586
        %588 = vdwg.mxu0
        %589 = vmatpush.bf16.msra.mxu0 %v523
        %590 = vmatpush.bf16.msra.mxu0 %v522
        %591 = vmatpush.bf16.msra.mxu0 %v521
        %592 = vmatpush.bf16.msra.mxu0 %v520
        %593 = vmatpush.bf16.msra.mxu0 %v519
        %594 = vmatpush.bf16.msra.mxu0 %v518
        %595 = vmatpush.bf16.msra.mxu0 %v517
        %596 = vmatpush.bf16.msra.mxu0 %v516
        %597 = vmatmul.bf16.gmra.mxu0 %v413
        %v598 = vpop.f32.mrf.mxu0
        %v599 = vadd.f32 %v550, %v598
        %v600 = vpop.f32.mrf.mxu0
        %v601 = vadd.f32 %v552, %v600
        %602 = vmatmul.bf16.gmra.mxu0 %v415
        %v603 = vpop.f32.mrf.mxu0
        %v604 = vadd.f32 %v555, %v603
        %v605 = vpop.f32.mrf.mxu0
        %v606 = vadd.f32 %v557, %v605
        %607 = vmatmul.bf16.gmra.mxu0 %v417
        %v608 = vpop.f32.mrf.mxu0
        %v609 = vadd.f32 %v560, %v608
        %v610 = vpop.f32.mrf.mxu0
        %v611 = vadd.f32 %v562, %v610
        %612 = vmatmul.bf16.gmra.mxu0 %v419
        %v613 = vpop.f32.mrf.mxu0
        %v614 = vadd.f32 %v565, %v613
        %v615 = vpop.f32.mrf.mxu0
        %v616 = vadd.f32 %v567, %v615
        %617 = vmatmul.bf16.gmra.mxu0 %v421
        %v618 = vpop.f32.mrf.mxu0
        %v619 = vadd.f32 %v570, %v618
        %v620 = vpop.f32.mrf.mxu0
        %v621 = vadd.f32 %v572, %v620
        %622 = vmatmul.bf16.gmra.mxu0 %v423
        %v623 = vpop.f32.mrf.mxu0
        %v624 = vadd.f32 %v575, %v623
        %v625 = vpop.f32.mrf.mxu0
        %v626 = vadd.f32 %v577, %v625
        %627 = vmatmul.bf16.gmra.mxu0 %v425
        %v628 = vpop.f32.mrf.mxu0
        %v629 = vadd.f32 %v580, %v628
        %v630 = vpop.f32.mrf.mxu0
        %v631 = vadd.f32 %v582, %v630
        %632 = vmatmul.bf16.gmra.mxu0 %v427
        %v633 = vpop.f32.mrf.mxu0
        %v634 = vadd.f32 %v585, %v633
        %v635 = vpop.f32.mrf.mxu0
        %v636 = vadd.f32 %v587, %v635
        %637 = vdwg.mxu0
        %v638 = vadd.f32 %v332, %v599
        %v639 = vadd.f32 %v333, %v601
        %v640 = vadd.f32 %v334, %v604
        %v641 = vadd.f32 %v335, %v606
        %v642 = vadd.f32 %v336, %v609
        %v643 = vadd.f32 %v337, %v611
        %v644 = vadd.f32 %v338, %v614
        %v645 = vadd.f32 %v339, %v616
        %v646 = vadd.f32 %v340, %v619
        %v647 = vadd.f32 %v341, %v621
        %v648 = vadd.f32 %v342, %v624
        %v649 = vadd.f32 %v343, %v626
        %v650 = vadd.f32 %v344, %v629
        %v651 = vadd.f32 %v345, %v631
        %v652 = vadd.f32 %v346, %v634
        %v653 = vadd.f32 %v347, %v636
        %654 = vst [vmem:[#allocation2] sm:$0xff] %v638
        %655 = vst [vmem:[#allocation2 + $0x8] sm:$0xff] %v639
        %656 = vst [vmem:[#allocation2 + $0x10] sm:$0xff] %v640
        %657 = vst [vmem:[#allocation2 + $0x18] sm:$0xff] %v641
        %658 = vst [vmem:[#allocation2 + $0x20] sm:$0xff] %v642
        %659 = vst [vmem:[#allocation2 + $0x28] sm:$0xff] %v643
        %660 = vst [vmem:[#allocation2 + $0x30] sm:$0xff] %v644
        %661 = vst [vmem:[#allocation2 + $0x38] sm:$0xff] %v645
        %662 = vst [vmem:[#allocation2 + $0x40] sm:$0xff] %v646
        %663 = vst [vmem:[#allocation2 + $0x48] sm:$0xff] %v647
        %664 = vst [vmem:[#allocation2 + $0x50] sm:$0xff] %v648
        %665 = vst [vmem:[#allocation2 + $0x58] sm:$0xff] %v649
        %666 = vst [vmem:[#allocation2 + $0x60] sm:$0xff] %v650
        %667 = vst [vmem:[#allocation2 + $0x68] sm:$0xff] %v651
        %668 = vst [vmem:[#allocation2 + $0x70] sm:$0xff] %v652
        %669 = vst [vmem:[#allocation2 + $0x78] sm:$0xff] %v653
        // Predicated region
        $region53: #{tpu_custom_call.1} parent=35 // pred_check
          %p670 = pneg %p280
        $region54: #{tpu_custom_call.1} parent=35 // pred_check_branch
          %672 = sbr.rel (%p670) target = $region56
        $region55: #{tpu_custom_call.1} parent=35 // pred_region
          %v673 = vld [vmem:[#allocation2] sm:$0xff]
          %v674 = vld [vmem:[#allocation2 + $0x8] sm:$0xff]
          %v675 = vld [vmem:[#allocation2 + $0x10] sm:$0xff]
          %v676 = vld [vmem:[#allocation2 + $0x18] sm:$0xff]
          %v677 = vld [vmem:[#allocation2 + $0x20] sm:$0xff]
          %v678 = vld [vmem:[#allocation2 + $0x28] sm:$0xff]
          %v679 = vld [vmem:[#allocation2 + $0x30] sm:$0xff]
          %v680 = vld [vmem:[#allocation2 + $0x38] sm:$0xff]
          %v681 = vld [vmem:[#allocation2 + $0x40] sm:$0xff]
          %v682 = vld [vmem:[#allocation2 + $0x48] sm:$0xff]
          %v683 = vld [vmem:[#allocation2 + $0x50] sm:$0xff]
          %v684 = vld [vmem:[#allocation2 + $0x58] sm:$0xff]
          %v685 = vld [vmem:[#allocation2 + $0x60] sm:$0xff]
          %v686 = vld [vmem:[#allocation2 + $0x68] sm:$0xff]
          %v687 = vld [vmem:[#allocation2 + $0x70] sm:$0xff]
          %v688 = vld [vmem:[#allocation2 + $0x78] sm:$0xff]
          %v689 = vpack.c.bf16 %v674, %v673
          %v690 = vpack.c.bf16 %v676, %v675
          %v691 = vpack.c.bf16 %v678, %v677
          %v692 = vpack.c.bf16 %v680, %v679
          %v693 = vpack.c.bf16 %v682, %v681
          %v694 = vpack.c.bf16 %v684, %v683
          %v695 = vpack.c.bf16 %v686, %v685
          %v696 = vpack.c.bf16 %v688, %v687
          %v697 = vld [vmem:[#allocation8] sm:$0xf]
          %v698 = vld [vmem:[#allocation8 + $0x4] sm:$0xf]
          %v699 = vld [vmem:[#allocation8 + $0x8] sm:$0xf]
          %v700 = vld [vmem:[#allocation8 + $0xc] sm:$0xf]
          %v701 = vld [vmem:[#allocation8 + $0x10] sm:$0xf]
          %v702 = vld [vmem:[#allocation8 + $0x14] sm:$0xf]
          %v703 = vld [vmem:[#allocation8 + $0x18] sm:$0xf]
          %v704 = vld [vmem:[#allocation8 + $0x1c] sm:$0xf]
          %v705 = vld [vmem:[#allocation8 + $0x20] sm:$0xf]
          %v706 = vld [vmem:[#allocation8 + $0x24] sm:$0xf]
          %v707 = vld [vmem:[#allocation8 + $0x28] sm:$0xf]
          %v708 = vld [vmem:[#allocation8 + $0x2c] sm:$0xf]
          %v709 = vld [vmem:[#allocation8 + $0x30] sm:$0xf]
          %v710 = vld [vmem:[#allocation8 + $0x34] sm:$0xf]
          %v711 = vld [vmem:[#allocation8 + $0x38] sm:$0xf]
          %v712 = vld [vmem:[#allocation8 + $0x3c] sm:$0xf]
          %v713 = vld [vmem:[%s3] sm:$0x1]
          %v714 = vunpack.c.l.bf16 %v713
          %v715 = vperm.slane %v714, 0
          %v732 = vunpack.c.l.b16 %v697
          %v733 = vunpack.c.l.b16 %v698
          %v734 = vunpack.c.l.b16 %v699
          %v735 = vunpack.c.l.b16 %v700
          %v736 = vunpack.c.l.b16 %v701
          %v737 = vunpack.c.l.b16 %v702
          %v738 = vunpack.c.l.b16 %v703
          %v739 = vunpack.c.l.b16 %v704
          %v740 = vunpack.c.l.b16 %v705
          %v741 = vunpack.c.l.b16 %v706
          %v742 = vunpack.c.l.b16 %v707
          %v743 = vunpack.c.l.b16 %v708
          %v744 = vunpack.c.l.b16 %v709
          %v745 = vunpack.c.l.b16 %v710
          %v746 = vunpack.c.l.b16 %v711
          %v747 = vunpack.c.l.b16 %v712
          %v748 = vpack.c.b16 %v733, %v732
          %v749 = vpack.c.b16 %v735, %v734
          %v750 = vpack.c.b16 %v737, %v736
          %v751 = vpack.c.b16 %v739, %v738
          %v752 = vpack.c.b16 %v741, %v740
          %v753 = vpack.c.b16 %v743, %v742
          %v754 = vpack.c.b16 %v745, %v744
          %v755 = vpack.c.b16 %v747, %v746
          %764 = vmatpush.bf16.msra.mxu0 %v755
          %765 = vmatpush.bf16.msra.mxu0 %v754
          %766 = vmatpush.bf16.msra.mxu0 %v753
          %767 = vmatpush.bf16.msra.mxu0 %v752
          %768 = vmatpush.bf16.msra.mxu0 %v751
          %769 = vmatpush.bf16.msra.mxu0 %v750
          %770 = vmatpush.bf16.msra.mxu0 %v749
          %771 = vmatpush.bf16.msra.mxu0 %v748
          %772 = vmatmul.bf16.gmra.mxu0 %v689
          %v773 = vpop.f32.mrf.mxu0
          %v774 = vadd.f32 %v715, %v773
          %v775 = vpop.f32.mrf.mxu0
          %v776 = vadd.f32 %v715, %v775
          %777 = vmatmul.bf16.gmra.mxu0 %v690
          %v778 = vpop.f32.mrf.mxu0
          %v779 = vadd.f32 %v715, %v778
          %v780 = vpop.f32.mrf.mxu0
          %v781 = vadd.f32 %v715, %v780
          %782 = vmatmul.bf16.gmra.mxu0 %v691
          %v783 = vpop.f32.mrf.mxu0
          %v784 = vadd.f32 %v715, %v783
          %v785 = vpop.f32.mrf.mxu0
          %v786 = vadd.f32 %v715, %v785
          %787 = vmatmul.bf16.gmra.mxu0 %v692
          %v788 = vpop.f32.mrf.mxu0
          %v789 = vadd.f32 %v715, %v788
          %v790 = vpop.f32.mrf.mxu0
          %v791 = vadd.f32 %v715, %v790
          %792 = vmatmul.bf16.gmra.mxu0 %v693
          %v793 = vpop.f32.mrf.mxu0
          %v794 = vadd.f32 %v715, %v793
          %v795 = vpop.f32.mrf.mxu0
          %v796 = vadd.f32 %v715, %v795
          %797 = vmatmul.bf16.gmra.mxu0 %v694
          %v798 = vpop.f32.mrf.mxu0
          %v799 = vadd.f32 %v715, %v798
          %v800 = vpop.f32.mrf.mxu0
          %v801 = vadd.f32 %v715, %v800
          %802 = vmatmul.bf16.gmra.mxu0 %v695
          %v803 = vpop.f32.mrf.mxu0
          %v804 = vadd.f32 %v715, %v803
          %v805 = vpop.f32.mrf.mxu0
          %v806 = vadd.f32 %v715, %v805
          %807 = vmatmul.bf16.gmra.mxu0 %v696
          %v808 = vpop.f32.mrf.mxu0
          %v809 = vadd.f32 %v715, %v808
          %v810 = vpop.f32.mrf.mxu0
          %v811 = vadd.f32 %v715, %v810
          %812 = vdwg.mxu0
          %v813 = vmax.f32 %v774, 0.0
          %v814 = vmax.f32 %v776, 0.0
          %v815 = vmax.f32 %v779, 0.0
          %v816 = vmax.f32 %v781, 0.0
          %v817 = vmax.f32 %v784, 0.0
          %v818 = vmax.f32 %v786, 0.0
          %v819 = vmax.f32 %v789, 0.0
          %v820 = vmax.f32 %v791, 0.0
          %v821 = vmax.f32 %v794, 0.0
          %v822 = vmax.f32 %v796, 0.0
          %v823 = vmax.f32 %v799, 0.0
          %v824 = vmax.f32 %v801, 0.0
          %v825 = vmax.f32 %v804, 0.0
          %v826 = vmax.f32 %v806, 0.0
          %v827 = vmax.f32 %v809, 0.0
          %v828 = vmax.f32 %v811, 0.0
          %v829 = vpack.c.bf16 %v813, %v813
          %v830 = vpack.c.bf16 %v814, %v814
          %v831 = vpack.c.bf16 %v815, %v815
          %v832 = vpack.c.bf16 %v816, %v816
          %v833 = vpack.c.bf16 %v817, %v817
          %v834 = vpack.c.bf16 %v818, %v818
          %v835 = vpack.c.bf16 %v819, %v819
          %v836 = vpack.c.bf16 %v820, %v820
          %v837 = vpack.c.bf16 %v821, %v821
          %v838 = vpack.c.bf16 %v822, %v822
          %v839 = vpack.c.bf16 %v823, %v823
          %v840 = vpack.c.bf16 %v824, %v824
          %v841 = vpack.c.bf16 %v825, %v825
          %v842 = vpack.c.bf16 %v826, %v826
          %v843 = vpack.c.bf16 %v827, %v827
          %v844 = vpack.c.bf16 %v828, %v828
          %845 = vst [vmem:[%s275] sm:$0xf] %v829
          %846 = vst [vmem:[%s275 + $0x4] sm:$0xf] %v830
          %847 = vst [vmem:[%s275 + $0x8] sm:$0xf] %v831
          %848 = vst [vmem:[%s275 + $0xc] sm:$0xf] %v832
          %849 = vst [vmem:[%s275 + $0x10] sm:$0xf] %v833
          %850 = vst [vmem:[%s275 + $0x14] sm:$0xf] %v834
          %851 = vst [vmem:[%s275 + $0x18] sm:$0xf] %v835
          %852 = vst [vmem:[%s275 + $0x1c] sm:$0xf] %v836
          %853 = vst [vmem:[%s275 + $0x20] sm:$0xf] %v837
          %854 = vst [vmem:[%s275 + $0x24] sm:$0xf] %v838
          %855 = vst [vmem:[%s275 + $0x28] sm:$0xf] %v839
          %856 = vst [vmem:[%s275 + $0x2c] sm:$0xf] %v840
          %857 = vst [vmem:[%s275 + $0x30] sm:$0xf] %v841
          %858 = vst [vmem:[%s275 + $0x34] sm:$0xf] %v842
          %859 = vst [vmem:[%s275 + $0x38] sm:$0xf] %v843
          %860 = vst [vmem:[%s275 + $0x3c] sm:$0xf] %v844
        $region56: #{tpu_custom_call.1} parent=35 // pred_fallthru
          _
        %s861 = sand.u32 %s138, 1
        %s862 = scalar_lea.sflag [#allocation5], %s861
        %s863 = sand.u32 %s138, 1
        %s864 = smul.addr %s863, 64
        %s865 = scalar_lea.vmem [#allocation9], %s864
        // Predicated region
        $region57: #{tpu_custom_call.1} parent=35 // pred_check
          %p866 = pneg %p148
        $region58: #{tpu_custom_call.1} parent=35 // pred_check_branch
          %868 = sbr.rel (%p866) target = $region60
        $region59: #{tpu_custom_call.1} parent=35 // pred_region
          %s869 = smul.u32 16, %s26
          %871 = vsyncadd %s862, 0
          %s872 = smul.addr %s869, 4
          %s873 = scalar_lea.hbm %s4, %s872
          %s874 = sshll.u32 %s865, 4
          %s875 = int_to_ptr.vmem [resolvable:$true] %s874
          %s876 = sshll.u32 %s873, 4
          %s877 = int_to_ptr.hbm [resolvable:$true] %s876
          %882 = dma.vmem_to_hbm [thread:$0]  %s875, 1024, %s877, %s862, 64, 64, 4
        $region60: #{tpu_custom_call.1} parent=35 // pred_fallthru
          _
      $region36: #{tpu_custom_call.1} parent=5 // pred_fallthru
        _
      %p883 = scmp.le.s32.totalorder 2, %s17
      // Predicated region
      $region61: #{tpu_custom_call.1} parent=5 // pred_check
        %p884 = pneg %p883
      $region62: #{tpu_custom_call.1} parent=5 // pred_check_branch
        %886 = sbr.rel (%p884) target = $region64
      $region63: #{tpu_custom_call.1} parent=5 // pred_region
        %s887 = ssub.s32 %s17, 2
        // Predicated region
        $region65: #{tpu_custom_call.1} parent=63 // pred_check
          %p888 = pneg %p154
        $region66: #{tpu_custom_call.1} parent=63 // pred_check_branch
          %890 = sbr.rel (%p888) target = $region68
        $region67: #{tpu_custom_call.1} parent=63 // pred_region
          %s891 = sand.u32 %s139, 1
          %s892 = scalar_lea.sflag [#allocation5], %s891
          %s893 = sand.u32 %s139, 1
          %s894 = smul.addr %s893, 64
          %s895 = scalar_lea.vmem [#allocation9], %s894
          %897 = dma.done %s892, 1024
        $region68: #{tpu_custom_call.1} parent=63 // pred_fallthru
          _
      $region64: #{tpu_custom_call.1} parent=5 // pred_fallthru
        _
    $region6: #{tpu_custom_call.1} parent=1 // loop_footer
      %s21 = sadd.s32 1, %s17
    $region7: #{tpu_custom_call.1} parent=1 // loop_footer_branch
      %16 = sbr.rel target = $region3
    $region8: #{tpu_custom_call.1} parent=1 // loop_exit
      _
    %898 = vsyncpa [#allocation4], 1
    %s899 = scalar_lea.sflag [#allocation4], 1
    %900 = vsyncpa %s899, 1
    %901 = vsyncpa [#allocation7], 1
    %902 = vsyncpa [#allocation5], 1
    %s903 = scalar_lea.sflag [#allocation5], 1
    %904 = vsyncpa %s903, 1

</llo_original>
